<compile_context>
chip_gen: v7x
topology: tpu7x:2x2x1
jax: 0.10.0
libtpu: 0.0.40
codegen_flags: <defaults>
</compile_context>

<pallas_src>
import jax
import jax.numpy as jnp
from jax.experimental import pallas as pl
from jax.experimental.pallas import tpu as pltpu

# --- adapt_config (Struct) ---------------------------------------------------
N_TASKS = 4
N_SKILLS = 4
N_SPLITS = 2
RANK = 8
BATCH = 8
D_IN = 256
D_OUT = 256
D_IN_SPLIT = D_IN // N_SPLITS
D_OUT_SPLIT = D_OUT // N_SPLITS
KR = N_SKILLS * RANK            # stacked skill*rank axis
# TODO(synk): selector dropout / l2_norm are train-time options; inference path only here.


def poly_adapted_dense_kernel(x_ref, wbase_ref, bias_ref, logits_ref,
                              lora_a_ref, lora_b_ref, out_ref, sw_ref, hw_ref):
    """Fused: selector softmax + frozen dense + Polytropon skilled LoRA.

    lora_a_ref: (S, D_IN_SPLIT, K*R)  bf16, A[s, d, k*R+r]
    lora_b_ref: (S, K*R, D_OUT_SPLIT) bf16, B[s, k*R+r, o] pre-scaled by 1/rank
    hw_ref:     (B, K*R) f32 VMEM scratch holding the per-split (w ⊗ h) operand
    """
    xb = x_ref[...].astype(jnp.bfloat16)                     # (B, D_IN) bf16 for MXU

    # --- PolytroponSelector: per-split softmax over skills --------------------
    lg = logits_ref[...]                                      # (B, S*K) f32
    w_split = []
    for s in range(N_SPLITS):
        lgs = lg[:, s * N_SKILLS:(s + 1) * N_SKILLS]
        m = jnp.max(lgs, axis=-1, keepdims=True)
        e = jnp.exp(lgs - m)
        inv = pl.reciprocal(jnp.sum(e, axis=-1, keepdims=True), approx=True)
        p = e * inv
        w_split.append(p)
        sw_ref[:, s * N_SKILLS:(s + 1) * N_SKILLS] = p.astype(sw_ref.dtype)

    # --- frozen base Linear (weight pre-transposed to (D_IN, D_OUT)) ----------
    y = jnp.dot(xb, wbase_ref[...], preferred_element_type=jnp.float32)
    y = y + bias_ref[...]                                     # (B, D_OUT) f32

    # --- Polytropon skilled LoRA: stacked-skill matmuls ------------------------
    #   u_s[b, k*R+r] = (x_s[b] @ A_s)[k*R+r]
    #   h[b, r]       = sum_{s,k} w[b,s,k] * u_s[b, k*R+r]
    #   lora_s[b, o]  = flatten_k,r(w[b,s,k] * h[b,r]) @ B_s   (B_s pre-scaled 1/rank)
    h = jnp.zeros((BATCH, RANK), jnp.float32)
    for s in range(N_SPLITS):
        x_s = xb[:, s * D_IN_SPLIT:(s + 1) * D_IN_SPLIT]
        u = jnp.dot(x_s, lora_a_ref[s],                       # (B,128)@(128,K*R)
                    preferred_element_type=jnp.float32)
        for k in range(N_SKILLS):
            h = h + w_split[s][:, k:k + 1] * u[:, k * RANK:(k + 1) * RANK]

    for s in range(N_SPLITS):
        # assemble (w[b,s,k] * h[b,r]) flattened along lanes in VMEM scratch
        for k in range(N_SKILLS):
            hw_ref[:, k * RANK:(k + 1) * RANK] = w_split[s][:, k:k + 1] * h
        lora_s = jnp.dot(hw_ref[...].astype(jnp.bfloat16),    # (B,K*R)@(K*R,128)
                         lora_b_ref[s], preferred_element_type=jnp.float32)
        out_ref[:, s * D_OUT_SPLIT:(s + 1) * D_OUT_SPLIT] = (
            y[:, s * D_OUT_SPLIT:(s + 1) * D_OUT_SPLIT] + lora_s
        ).astype(out_ref.dtype)                                # 128-lane aligned store


def prepare_params(params):
    """One-time repack into kernel-friendly dtypes/layouts (outside the forward jit)."""
    a = params["lora_a"]                                      # (S, K, D_IN_SPLIT, R)
    b = params["lora_b"]                                      # (S, K, R, D_OUT_SPLIT)
    a_stacked = jnp.transpose(a, (0, 2, 1, 3)).reshape(N_SPLITS, D_IN_SPLIT, KR)
    b_stacked = (b / RANK).reshape(N_SPLITS, KR, D_OUT_SPLIT)  # fold 1/rank here
    return {
        "module_logits": params["module_logits"],                    # (T, S*K) f32
        "w_base_t": params["w_base"].T.astype(jnp.bfloat16),         # (D_IN, D_OUT)
        "b_base": params["b_base"].reshape(1, D_OUT).astype(jnp.float32),
        "lora_a_s": a_stacked.astype(jnp.bfloat16),
        "lora_b_s": b_stacked.astype(jnp.bfloat16),
    }


@jax.jit
def adapted_model_forward(prep, x, routes):
    # glue: selector gather of per-example module logits (task routing)
    logits = prep["module_logits"][routes]                    # (B, S*K) f32

    vmem = pl.BlockSpec(memory_space=pltpu.MemorySpace.VMEM)
    out, skill_weights = pl.pallas_call(
        poly_adapted_dense_kernel,
        out_shape=(
            jax.ShapeDtypeStruct((BATCH, D_OUT), jnp.float32),
            jax.ShapeDtypeStruct((BATCH, N_SPLITS * N_SKILLS), jnp.float32),
        ),
        in_specs=[vmem] * 6,
        out_specs=(vmem, vmem),
        scratch_shapes=[pltpu.VMEM((BATCH, KR), jnp.float32)],
    )(x, prep["w_base_t"], prep["b_base"], logits,
      prep["lora_a_s"], prep["lora_b_s"])
    return out, skill_weights                                  # (p, w)


def reference_forward(params, x, routes):
    """Pure-JAX reference of the same forward (for validation)."""
    hp = jax.lax.Precision.HIGHEST
    logits = params["module_logits"][routes].reshape(BATCH, N_SPLITS, N_SKILLS)
    w = jax.nn.softmax(logits, axis=-1)                                   # (B,S,K)
    A = jnp.einsum("bsk,skdr->bsdr", w, params["lora_a"], precision=hp)
    Bm = jnp.einsum("bsk,skro->bsro", w, params["lora_b"], precision=hp)
    A = A.reshape(BATCH, D_IN, RANK)
    Bm = jnp.transpose(Bm, (0, 2, 1, 3)).reshape(BATCH, RANK, D_OUT)
    base = jnp.dot(x, params["w_base"].T, precision=hp) + params["b_base"]
    h = jnp.einsum("bd,bdr->br", x, A, precision=hp)
    lora = jnp.einsum("br,bro->bo", h, Bm, precision=hp) / RANK
    return base + lora, w.reshape(BATCH, N_SPLITS * N_SKILLS)


def init_params(key):
    k0, k1, k2, k3, k4 = jax.random.split(key, 5)
    return {
        # PolytroponSelector.module_logits
        "module_logits": jax.random.normal(
            k0, (N_TASKS, N_SPLITS * N_SKILLS), jnp.float32),
        # frozen base Linear (PyTorch layout: (out_features, in_features))
        "w_base": 0.02 * jax.random.normal(k1, (D_OUT, D_IN), jnp.float32),
        "b_base": 0.02 * jax.random.normal(k2, (D_OUT,), jnp.float32),
        # PolyDenseAdapter skilled LoRA params
        # TODO(synk): real LoRA inits lora_b to zeros; use small randoms so the path is exercised.
        "lora_a": (1.0 / jnp.sqrt(D_IN_SPLIT)) * jax.random.normal(
            k3, (N_SPLITS, N_SKILLS, D_IN_SPLIT, RANK), jnp.float32),
        "lora_b": 0.01 * jax.random.normal(
            k4, (N_SPLITS, N_SKILLS, RANK, D_OUT_SPLIT), jnp.float32),
    }


if __name__ == "__main__":
    key = jax.random.PRNGKey(0)
    kp, kx, kr = jax.random.split(key, 3)
    params = init_params(kp)
    prep = prepare_params(params)                       # one-time repack (bf16, stacked)
    x = jax.random.normal(kx, (BATCH, D_IN), jnp.float32)
    routes = jax.random.randint(kr, (BATCH,), 0, N_TASKS, dtype=jnp.int32)

    p, w = adapted_model_forward(prep, x, routes)
    jax.block_until_ready((p, w))

    p_ref, w_ref = reference_forward(params, x, routes)
    assert p.shape == (BATCH, D_OUT) and w.shape == (BATCH, N_SPLITS * N_SKILLS)
    assert jnp.allclose(p, p_ref, rtol=1e-2, atol=1e-2)
    assert jnp.allclose(w, w_ref, rtol=1e-2, atol=1e-2)
    print("KERNEL_OK")
</pallas_src>

<mosaic_0001>
module attributes {stable_mosaic.version = 11 : i64} {
  func.func @poly_adapted_dense_kernel(%arg0: memref<8x256xf32, #tpu.memory_space<vmem>>, %arg1: memref<256x256xbf16, #tpu.memory_space<vmem>>, %arg2: memref<1x256xf32, #tpu.memory_space<vmem>>, %arg3: memref<8x8xf32, #tpu.memory_space<vmem>>, %arg4: memref<2x128x32xbf16, #tpu.memory_space<vmem>>, %arg5: memref<2x32x128xbf16, #tpu.memory_space<vmem>>, %arg6: memref<8x256xf32, #tpu.memory_space<vmem>>, %arg7: memref<8x8xf32, #tpu.memory_space<vmem>>, %arg8: memref<8x32xf32, #tpu.memory_space<vmem>>) attributes {dimension_semantics = [], scalar_prefetch = 0 : i64, scratch_operands = 1 : i64, tpu.core_type = #tpu.core_type<tc>} {
    %c0 = arith.constant 0 : index
    %c0_0 = arith.constant 0 : index
    %0 = vector.load %arg0[%c0, %c0_0] : memref<8x256xf32, #tpu.memory_space<vmem>>, vector<8x256xf32>
    %1 = arith.truncf %0 : vector<8x256xf32> to vector<8x256xbf16>
    %c0_1 = arith.constant 0 : index
    %c0_2 = arith.constant 0 : index
    %2 = vector.load %arg3[%c0_1, %c0_2] : memref<8x8xf32, #tpu.memory_space<vmem>>, vector<8x8xf32>
    %3 = vector.extract_strided_slice %2 {offsets = [0, 0], sizes = [8, 4], strides = [1, 1]} : vector<8x8xf32> to vector<8x4xf32>
    %cst = arith.constant dense<0xFF800000> : vector<8xf32>
    %4 = vector.multi_reduction <maximumf>, %3, %cst [1] : vector<8x4xf32> to vector<8xf32>
    %5 = vector.shape_cast %4 : vector<8xf32> to vector<8x1xf32>
    %6 = vector.broadcast %5 : vector<8x1xf32> to vector<8x4xf32>
    %7 = arith.subf %3, %6 : vector<8x4xf32>
    %8 = math.exp %7 : vector<8x4xf32>
    %cst_3 = arith.constant dense<0.000000e+00> : vector<8xf32>
    %9 = vector.multi_reduction <add>, %8, %cst_3 [1] : vector<8x4xf32> to vector<8xf32>
    %10 = vector.shape_cast %9 : vector<8xf32> to vector<8x1xf32>
    %11 = tpu.reciprocal %10 {approx = true} : vector<8x1xf32> -> vector<8x1xf32>
    %12 = vector.broadcast %11 : vector<8x1xf32> to vector<8x4xf32>
    %13 = arith.mulf %8, %12 : vector<8x4xf32>
    %c0_4 = arith.constant 0 : index
    %c0_5 = arith.constant 0 : index
    %14 = vector.load %arg7[%c0_4, %c0_5] : memref<8x8xf32, #tpu.memory_space<vmem>>, vector<8x4xf32>
    tpu.vector_store %arg7[%c0_4, %c0_5], %13 {strides = array<i32>} : memref<8x8xf32, #tpu.memory_space<vmem>>, vector<8x4xf32>,
    %15 = vector.extract_strided_slice %2 {offsets = [0, 4], sizes = [8, 4], strides = [1, 1]} : vector<8x8xf32> to vector<8x4xf32>
    %cst_6 = arith.constant dense<0xFF800000> : vector<8xf32>
    %16 = vector.multi_reduction <maximumf>, %15, %cst_6 [1] : vector<8x4xf32> to vector<8xf32>
    %17 = vector.shape_cast %16 : vector<8xf32> to vector<8x1xf32>
    %18 = vector.broadcast %17 : vector<8x1xf32> to vector<8x4xf32>
    %19 = arith.subf %15, %18 : vector<8x4xf32>
    %20 = math.exp %19 : vector<8x4xf32>
    %cst_7 = arith.constant dense<0.000000e+00> : vector<8xf32>
    %21 = vector.multi_reduction <add>, %20, %cst_7 [1] : vector<8x4xf32> to vector<8xf32>
    %22 = vector.shape_cast %21 : vector<8xf32> to vector<8x1xf32>
    %23 = tpu.reciprocal %22 {approx = true} : vector<8x1xf32> -> vector<8x1xf32>
    %24 = vector.broadcast %23 : vector<8x1xf32> to vector<8x4xf32>
    %25 = arith.mulf %20, %24 : vector<8x4xf32>
    %c0_8 = arith.constant 0 : index
    %c4 = arith.constant 4 : index
    %26 = vector.load %arg7[%c0_8, %c4] : memref<8x8xf32, #tpu.memory_space<vmem>>, vector<8x4xf32>
    tpu.vector_store %arg7[%c0_8, %c4], %25 {strides = array<i32>} : memref<8x8xf32, #tpu.memory_space<vmem>>, vector<8x4xf32>,
    %c0_9 = arith.constant 0 : index
    %c0_10 = arith.constant 0 : index
    %27 = vector.load %arg1[%c0_9, %c0_10] : memref<256x256xbf16, #tpu.memory_space<vmem>>, vector<256x256xbf16>
    %cst_11 = arith.constant dense<0.000000e+00> : vector<8x256xf32>
    %28 = tpu.matmul %1, %27, %cst_11 {dimension_numbers = #tpu.dot_dimension_numbers<[1], [0], [0], [1], [0, 0, 1, 1], [], []>} : vector<8x256xbf16>, vector<256x256xbf16>, vector<8x256xf32> -> vector<8x256xf32>
    %c0_12 = arith.constant 0 : index
    %c0_13 = arith.constant 0 : index
    %29 = vector.load %arg2[%c0_12, %c0_13] : memref<1x256xf32, #tpu.memory_space<vmem>>, vector<1x256xf32>
    %30 = vector.broadcast %29 : vector<1x256xf32> to vector<8x256xf32>
    %31 = arith.addf %28, %30 : vector<8x256xf32>
    %cst_14 = arith.constant 0.000000e+00 : f32
    %32 = vector.broadcast %cst_14 : f32 to vector<8x8xf32>
    %33 = vector.extract_strided_slice %1 {offsets = [0, 0], sizes = [8, 128], strides = [1, 1]} : vector<8x256xbf16> to vector<8x128xbf16>
    %c0_15 = arith.constant 0 : index
    %c0_16 = arith.constant 0 : index
    %c0_17 = arith.constant 0 : index
    %34 = vector.load %arg4[%c0_15, %c0_16, %c0_17] : memref<2x128x32xbf16, #tpu.memory_space<vmem>>, vector<1x128x32xbf16>
    %35 = vector.shape_cast %34 : vector<1x128x32xbf16> to vector<128x32xbf16>
    %cst_18 = arith.constant dense<0.000000e+00> : vector<8x32xf32>
    %36 = tpu.matmul %33, %35, %cst_18 {dimension_numbers = #tpu.dot_dimension_numbers<[1], [0], [0], [1], [0, 0, 1, 1], [], []>} : vector<8x128xbf16>, vector<128x32xbf16>, vector<8x32xf32> -> vector<8x32xf32>
    %37 = vector.extract_strided_slice %13 {offsets = [0, 0], sizes = [8, 1], strides = [1, 1]} : vector<8x4xf32> to vector<8x1xf32>
    %38 = vector.extract_strided_slice %36 {offsets = [0, 0], sizes = [8, 8], strides = [1, 1]} : vector<8x32xf32> to vector<8x8xf32>
    %39 = vector.broadcast %37 : vector<8x1xf32> to vector<8x8xf32>
    %40 = arith.mulf %39, %38 : vector<8x8xf32>
    %41 = arith.addf %32, %40 : vector<8x8xf32>
    %42 = vector.extract_strided_slice %13 {offsets = [0, 1], sizes = [8, 1], strides = [1, 1]} : vector<8x4xf32> to vector<8x1xf32>
    %43 = vector.extract_strided_slice %36 {offsets = [0, 8], sizes = [8, 8], strides = [1, 1]} : vector<8x32xf32> to vector<8x8xf32>
    %44 = vector.broadcast %42 : vector<8x1xf32> to vector<8x8xf32>
    %45 = arith.mulf %44, %43 : vector<8x8xf32>
    %46 = arith.addf %41, %45 : vector<8x8xf32>
    %47 = vector.extract_strided_slice %13 {offsets = [0, 2], sizes = [8, 1], strides = [1, 1]} : vector<8x4xf32> to vector<8x1xf32>
    %48 = vector.extract_strided_slice %36 {offsets = [0, 16], sizes = [8, 8], strides = [1, 1]} : vector<8x32xf32> to vector<8x8xf32>
    %49 = vector.broadcast %47 : vector<8x1xf32> to vector<8x8xf32>
    %50 = arith.mulf %49, %48 : vector<8x8xf32>
    %51 = arith.addf %46, %50 : vector<8x8xf32>
    %52 = vector.extract_strided_slice %13 {offsets = [0, 3], sizes = [8, 1], strides = [1, 1]} : vector<8x4xf32> to vector<8x1xf32>
    %53 = vector.extract_strided_slice %36 {offsets = [0, 24], sizes = [8, 8], strides = [1, 1]} : vector<8x32xf32> to vector<8x8xf32>
    %54 = vector.broadcast %52 : vector<8x1xf32> to vector<8x8xf32>
    %55 = arith.mulf %54, %53 : vector<8x8xf32>
    %56 = arith.addf %51, %55 : vector<8x8xf32>
    %57 = vector.extract_strided_slice %1 {offsets = [0, 128], sizes = [8, 128], strides = [1, 1]} : vector<8x256xbf16> to vector<8x128xbf16>
    %c1 = arith.constant 1 : index
    %c0_19 = arith.constant 0 : index
    %c0_20 = arith.constant 0 : index
    %58 = vector.load %arg4[%c1, %c0_19, %c0_20] : memref<2x128x32xbf16, #tpu.memory_space<vmem>>, vector<1x128x32xbf16>
    %59 = vector.shape_cast %58 : vector<1x128x32xbf16> to vector<128x32xbf16>
    %cst_21 = arith.constant dense<0.000000e+00> : vector<8x32xf32>
    %60 = tpu.matmul %57, %59, %cst_21 {dimension_numbers = #tpu.dot_dimension_numbers<[1], [0], [0], [1], [0, 0, 1, 1], [], []>} : vector<8x128xbf16>, vector<128x32xbf16>, vector<8x32xf32> -> vector<8x32xf32>
    %61 = vector.extract_strided_slice %25 {offsets = [0, 0], sizes = [8, 1], strides = [1, 1]} : vector<8x4xf32> to vector<8x1xf32>
    %62 = vector.extract_strided_slice %60 {offsets = [0, 0], sizes = [8, 8], strides = [1, 1]} : vector<8x32xf32> to vector<8x8xf32>
    %63 = vector.broadcast %61 : vector<8x1xf32> to vector<8x8xf32>
    %64 = arith.mulf %63, %62 : vector<8x8xf32>
    %65 = arith.addf %56, %64 : vector<8x8xf32>
    %66 = vector.extract_strided_slice %25 {offsets = [0, 1], sizes = [8, 1], strides = [1, 1]} : vector<8x4xf32> to vector<8x1xf32>
    %67 = vector.extract_strided_slice %60 {offsets = [0, 8], sizes = [8, 8], strides = [1, 1]} : vector<8x32xf32> to vector<8x8xf32>
    %68 = vector.broadcast %66 : vector<8x1xf32> to vector<8x8xf32>
    %69 = arith.mulf %68, %67 : vector<8x8xf32>
    %70 = arith.addf %65, %69 : vector<8x8xf32>
    %71 = vector.extract_strided_slice %25 {offsets = [0, 2], sizes = [8, 1], strides = [1, 1]} : vector<8x4xf32> to vector<8x1xf32>
    %72 = vector.extract_strided_slice %60 {offsets = [0, 16], sizes = [8, 8], strides = [1, 1]} : vector<8x32xf32> to vector<8x8xf32>
    %73 = vector.broadcast %71 : vector<8x1xf32> to vector<8x8xf32>
    %74 = arith.mulf %73, %72 : vector<8x8xf32>
    %75 = arith.addf %70, %74 : vector<8x8xf32>
    %76 = vector.extract_strided_slice %25 {offsets = [0, 3], sizes = [8, 1], strides = [1, 1]} : vector<8x4xf32> to vector<8x1xf32>
    %77 = vector.extract_strided_slice %60 {offsets = [0, 24], sizes = [8, 8], strides = [1, 1]} : vector<8x32xf32> to vector<8x8xf32>
    %78 = vector.broadcast %76 : vector<8x1xf32> to vector<8x8xf32>
    %79 = arith.mulf %78, %77 : vector<8x8xf32>
    %80 = arith.addf %75, %79 : vector<8x8xf32>
    %81 = vector.extract_strided_slice %13 {offsets = [0, 0], sizes = [8, 1], strides = [1, 1]} : vector<8x4xf32> to vector<8x1xf32>
    %82 = vector.broadcast %81 : vector<8x1xf32> to vector<8x8xf32>
    %83 = arith.mulf %82, %80 : vector<8x8xf32>
    %c0_22 = arith.constant 0 : index
    %c0_23 = arith.constant 0 : index
    %84 = vector.load %arg8[%c0_22, %c0_23] : memref<8x32xf32, #tpu.memory_space<vmem>>, vector<8x8xf32>
    tpu.vector_store %arg8[%c0_22, %c0_23], %83 {strides = array<i32>} : memref<8x32xf32, #tpu.memory_space<vmem>>, vector<8x8xf32>,
    %85 = vector.extract_strided_slice %13 {offsets = [0, 1], sizes = [8, 1], strides = [1, 1]} : vector<8x4xf32> to vector<8x1xf32>
    %86 = vector.broadcast %85 : vector<8x1xf32> to vector<8x8xf32>
    %87 = arith.mulf %86, %80 : vector<8x8xf32>
    %c0_24 = arith.constant 0 : index
    %c8 = arith.constant 8 : index
    %88 = vector.load %arg8[%c0_24, %c8] : memref<8x32xf32, #tpu.memory_space<vmem>>, vector<8x8xf32>
    tpu.vector_store %arg8[%c0_24, %c8], %87 {strides = array<i32>} : memref<8x32xf32, #tpu.memory_space<vmem>>, vector<8x8xf32>,
    %89 = vector.extract_strided_slice %13 {offsets = [0, 2], sizes = [8, 1], strides = [1, 1]} : vector<8x4xf32> to vector<8x1xf32>
    %90 = vector.broadcast %89 : vector<8x1xf32> to vector<8x8xf32>
    %91 = arith.mulf %90, %80 : vector<8x8xf32>
    %c0_25 = arith.constant 0 : index
    %c16 = arith.constant 16 : index
    %92 = vector.load %arg8[%c0_25, %c16] : memref<8x32xf32, #tpu.memory_space<vmem>>, vector<8x8xf32>
    tpu.vector_store %arg8[%c0_25, %c16], %91 {strides = array<i32>} : memref<8x32xf32, #tpu.memory_space<vmem>>, vector<8x8xf32>,
    %93 = vector.extract_strided_slice %13 {offsets = [0, 3], sizes = [8, 1], strides = [1, 1]} : vector<8x4xf32> to vector<8x1xf32>
    %94 = vector.broadcast %93 : vector<8x1xf32> to vector<8x8xf32>
    %95 = arith.mulf %94, %80 : vector<8x8xf32>
    %c0_26 = arith.constant 0 : index
    %c24 = arith.constant 24 : index
    %96 = vector.load %arg8[%c0_26, %c24] : memref<8x32xf32, #tpu.memory_space<vmem>>, vector<8x8xf32>
    tpu.vector_store %arg8[%c0_26, %c24], %95 {strides = array<i32>} : memref<8x32xf32, #tpu.memory_space<vmem>>, vector<8x8xf32>,
    %c0_27 = arith.constant 0 : index
    %c0_28 = arith.constant 0 : index
    %97 = vector.load %arg8[%c0_27, %c0_28] : memref<8x32xf32, #tpu.memory_space<vmem>>, vector<8x32xf32>
    %98 = arith.truncf %97 : vector<8x32xf32> to vector<8x32xbf16>
    %c0_29 = arith.constant 0 : index
    %c0_30 = arith.constant 0 : index
    %c0_31 = arith.constant 0 : index
    %99 = vector.load %arg5[%c0_29, %c0_30, %c0_31] : memref<2x32x128xbf16, #tpu.memory_space<vmem>>, vector<1x32x128xbf16>
    %100 = vector.shape_cast %99 : vector<1x32x128xbf16> to vector<32x128xbf16>
    %cst_32 = arith.constant dense<0.000000e+00> : vector<8x128xf32>
    %101 = tpu.matmul %98, %100, %cst_32 {dimension_numbers = #tpu.dot_dimension_numbers<[1], [0], [0], [1], [0, 0, 1, 1], [], []>} : vector<8x32xbf16>, vector<32x128xbf16>, vector<8x128xf32> -> vector<8x128xf32>
    %102 = vector.extract_strided_slice %31 {offsets = [0, 0], sizes = [8, 128], strides = [1, 1]} : vector<8x256xf32> to vector<8x128xf32>
    %103 = arith.addf %102, %101 : vector<8x128xf32>
    %c0_33 = arith.constant 0 : index
    %c0_34 = arith.constant 0 : index
    %104 = vector.load %arg6[%c0_33, %c0_34] : memref<8x256xf32, #tpu.memory_space<vmem>>, vector<8x128xf32>
    tpu.vector_store %arg6[%c0_33, %c0_34], %103 {strides = array<i32>} : memref<8x256xf32, #tpu.memory_space<vmem>>, vector<8x128xf32>,
    %105 = vector.extract_strided_slice %25 {offsets = [0, 0], sizes = [8, 1], strides = [1, 1]} : vector<8x4xf32> to vector<8x1xf32>
    %106 = vector.broadcast %105 : vector<8x1xf32> to vector<8x8xf32>
    %107 = arith.mulf %106, %80 : vector<8x8xf32>
    %c0_35 = arith.constant 0 : index
    %c0_36 = arith.constant 0 : index
    %108 = vector.load %arg8[%c0_35, %c0_36] : memref<8x32xf32, #tpu.memory_space<vmem>>, vector<8x8xf32>
    tpu.vector_store %arg8[%c0_35, %c0_36], %107 {strides = array<i32>} : memref<8x32xf32, #tpu.memory_space<vmem>>, vector<8x8xf32>,
    %109 = vector.extract_strided_slice %25 {offsets = [0, 1], sizes = [8, 1], strides = [1, 1]} : vector<8x4xf32> to vector<8x1xf32>
    %110 = vector.broadcast %109 : vector<8x1xf32> to vector<8x8xf32>
    %111 = arith.mulf %110, %80 : vector<8x8xf32>
    %c0_37 = arith.constant 0 : index
    %c8_38 = arith.constant 8 : index
    %112 = vector.load %arg8[%c0_37, %c8_38] : memref<8x32xf32, #tpu.memory_space<vmem>>, vector<8x8xf32>
    tpu.vector_store %arg8[%c0_37, %c8_38], %111 {strides = array<i32>} : memref<8x32xf32, #tpu.memory_space<vmem>>, vector<8x8xf32>,
    %113 = vector.extract_strided_slice %25 {offsets = [0, 2], sizes = [8, 1], strides = [1, 1]} : vector<8x4xf32> to vector<8x1xf32>
    %114 = vector.broadcast %113 : vector<8x1xf32> to vector<8x8xf32>
    %115 = arith.mulf %114, %80 : vector<8x8xf32>
    %c0_39 = arith.constant 0 : index
    %c16_40 = arith.constant 16 : index
    %116 = vector.load %arg8[%c0_39, %c16_40] : memref<8x32xf32, #tpu.memory_space<vmem>>, vector<8x8xf32>
    tpu.vector_store %arg8[%c0_39, %c16_40], %115 {strides = array<i32>} : memref<8x32xf32, #tpu.memory_space<vmem>>, vector<8x8xf32>,
    %117 = vector.extract_strided_slice %25 {offsets = [0, 3], sizes = [8, 1], strides = [1, 1]} : vector<8x4xf32> to vector<8x1xf32>
    %118 = vector.broadcast %117 : vector<8x1xf32> to vector<8x8xf32>
    %119 = arith.mulf %118, %80 : vector<8x8xf32>
    %c0_41 = arith.constant 0 : index
    %c24_42 = arith.constant 24 : index
    %120 = vector.load %arg8[%c0_41, %c24_42] : memref<8x32xf32, #tpu.memory_space<vmem>>, vector<8x8xf32>
    tpu.vector_store %arg8[%c0_41, %c24_42], %119 {strides = array<i32>} : memref<8x32xf32, #tpu.memory_space<vmem>>, vector<8x8xf32>,
    %c0_43 = arith.constant 0 : index
    %c0_44 = arith.constant 0 : index
    %121 = vector.load %arg8[%c0_43, %c0_44] : memref<8x32xf32, #tpu.memory_space<vmem>>, vector<8x32xf32>
    %122 = arith.truncf %121 : vector<8x32xf32> to vector<8x32xbf16>
    %c1_45 = arith.constant 1 : index
    %c0_46 = arith.constant 0 : index
    %c0_47 = arith.constant 0 : index
    %123 = vector.load %arg5[%c1_45, %c0_46, %c0_47] : memref<2x32x128xbf16, #tpu.memory_space<vmem>>, vector<1x32x128xbf16>
    %124 = vector.shape_cast %123 : vector<1x32x128xbf16> to vector<32x128xbf16>
    %cst_48 = arith.constant dense<0.000000e+00> : vector<8x128xf32>
    %125 = tpu.matmul %122, %124, %cst_48 {dimension_numbers = #tpu.dot_dimension_numbers<[1], [0], [0], [1], [0, 0, 1, 1], [], []>} : vector<8x32xbf16>, vector<32x128xbf16>, vector<8x128xf32> -> vector<8x128xf32>
    %126 = vector.extract_strided_slice %31 {offsets = [0, 128], sizes = [8, 128], strides = [1, 1]} : vector<8x256xf32> to vector<8x128xf32>
    %127 = arith.addf %126, %125 : vector<8x128xf32>
    %c0_49 = arith.constant 0 : index
    %c128 = arith.constant 128 : index
    %128 = vector.load %arg6[%c0_49, %c128] : memref<8x256xf32, #tpu.memory_space<vmem>>, vector<8x128xf32>
    tpu.vector_store %arg6[%c0_49, %c128], %127 {strides = array<i32>} : memref<8x256xf32, #tpu.memory_space<vmem>>, vector<8x128xf32>,
    return
  }
}

</mosaic_0001>

<llo_original>
// kernel: adapted_model_forward.1
$region0: #{adapted_model_forward.1}
  #allocation0 [shape = 'u32[]', space=smem, size = 0x4, offset = 0x4, fixed_abs, tag = 'smem constant byte address 0x4 - core index']
  #allocation1 [shape = 'u32[144,128]{1,0:T(1,128)}', space=vmem, size = 0x12000, scoped, tag = 'internal scratch']
  #allocation2 [shape = 'f32[8,32]{1,0:T(8,128)}', space=vmem, size = 0x1000, scoped, tag = 'scratch operand']
  %s0 = inlined_call_operand.hbm [shape: f32[8,256], index: 0, kind: input, shape index: {}]
  %s1 = inlined_call_operand.vmem [shape: bf16[256,256], index: 1, kind: input, shape index: {}]
  %s2 = inlined_call_operand.vmem [shape: f32[1,256], index: 2, kind: input, shape index: {}]
  %s3 = inlined_call_operand.vmem [shape: f32[8,8], index: 3, kind: input, shape index: {}]
  %s4 = inlined_call_operand.vmem [shape: bf16[2,128,32], index: 4, kind: input, shape index: {}]
  %s5 = inlined_call_operand.hbm [shape: bf16[2,32,128], index: 5, kind: input, shape index: {}]
  %s6 = inlined_call_operand.hbm [shape: f32[8,256], index: 6, kind: output, shape index: {0}]
  %s7 = inlined_call_operand.hbm [shape: f32[8,8], index: 7, kind: output, shape index: {1}]
  %8 = xla_tuple %s6, %s7
  %s9 = sld [smem:[#allocation0]]
  $region50: #{adapted_model_forward.1} parent=0
    _
  %s11 = ssub.s32 1, %s9
  %s12 = scalar_select 0, %s11, %s9
  $region1: #{adapted_model_forward.1} parent=0
    #allocation3 [shape = 'u8[8192]{0}', space=vmem, size = 0x2000, scoped, tag = 'input window, operand 0, single buffered']
    #allocation4 [shape = 's32[1]{0}', space=sflag, size = 0x4, scoped, tag = 'scoped memory for adapted_model_forward.1']
    #allocation5 [shape = 's32[1]{0}', space=sflag, size = 0x4, scoped, tag = 'scoped memory for adapted_model_forward.1']
    #allocation6 [shape = 'u8[16384]{0}', space=vmem, size = 0x4000, scoped, tag = 'input window, operand 5, single buffered']
    #allocation7 [shape = 's32[1]{0}', space=sflag, size = 0x4, scoped, tag = 'scoped memory for adapted_model_forward.1']
    #allocation8 [shape = 'u8[8192]{0}', space=vmem, size = 0x2000, scoped, tag = 'output window, operand 0, single buffered']
    #allocation9 [shape = 'u8[4096]{0}', space=vmem, size = 0x1000, scoped, tag = 'output window, operand 1, single buffered']
    #allocation10 [shape = 's32[1]{0}', space=sflag, size = 0x4, scoped, tag = 'scoped memory for adapted_model_forward.1']
    %13 = vsyncpa [#allocation4], 0
    %14 = vsyncpa [#allocation7], 0
    %15 = vsyncpa [#allocation5], 0
    %16 = vsyncpa [#allocation10], 0
    // Predicated region
    $region2: #{adapted_model_forward.1} parent=1 // pred_check
      _
    $region3: #{adapted_model_forward.1} parent=1 // pred_check_branch
      %18 = sbr.rel (0) target = $region5
    $region4: #{adapted_model_forward.1} parent=1 // pred_region
      %s20 = ssub.s32 256, 256
      %21 = vsyncadd [#allocation4], %s20
      %s23 = sshll.u32 [#allocation3], 4
      %s24 = int_to_ptr.vmem [resolvable:$true] %s23
      %26 = dma.hbm_to_vmem [thread:$0]  %s0, 256, %s24, [#allocation4]
    $region5: #{adapted_model_forward.1} parent=1 // pred_fallthru
      _
    // Predicated region
    $region6: #{adapted_model_forward.1} parent=1 // pred_check
      _
    $region7: #{adapted_model_forward.1} parent=1 // pred_check_branch
      %28 = sbr.rel (0) target = $region9
    $region8: #{adapted_model_forward.1} parent=1 // pred_region
      _
    $region9: #{adapted_model_forward.1} parent=1 // pred_fallthru
      _
    // Predicated region
    $region10: #{adapted_model_forward.1} parent=1 // pred_check
      _
    $region11: #{adapted_model_forward.1} parent=1 // pred_check_branch
      %30 = sbr.rel (0) target = $region13
    $region12: #{adapted_model_forward.1} parent=1 // pred_region
      _
    $region13: #{adapted_model_forward.1} parent=1 // pred_fallthru
      _
    // Predicated region
    $region14: #{adapted_model_forward.1} parent=1 // pred_check
      _
    $region15: #{adapted_model_forward.1} parent=1 // pred_check_branch
      %32 = sbr.rel (0) target = $region17
    $region16: #{adapted_model_forward.1} parent=1 // pred_region
      _
    $region17: #{adapted_model_forward.1} parent=1 // pred_fallthru
      _
    // Predicated region
    $region18: #{adapted_model_forward.1} parent=1 // pred_check
      _
    $region19: #{adapted_model_forward.1} parent=1 // pred_check_branch
      %34 = sbr.rel (0) target = $region21
    $region20: #{adapted_model_forward.1} parent=1 // pred_region
      _
    $region21: #{adapted_model_forward.1} parent=1 // pred_fallthru
      _
    // Predicated region
    $region22: #{adapted_model_forward.1} parent=1 // pred_check
      _
    $region23: #{adapted_model_forward.1} parent=1 // pred_check_branch
      %36 = sbr.rel (0) target = $region25
    $region24: #{adapted_model_forward.1} parent=1 // pred_region
      %s38 = ssub.s32 512, 512
      %39 = vsyncadd [#allocation7], %s38
      %s40 = sshll.u32 [#allocation6], 4
      %s41 = int_to_ptr.vmem [resolvable:$true] %s40
      %46 = dma.hbm_to_vmem [thread:$0]  %s5, 512, %s41, [#allocation7], 64, 64, 4
    $region25: #{adapted_model_forward.1} parent=1 // pred_fallthru
      _
    // Predicated region
    $region26: #{adapted_model_forward.1} parent=1 // pred_check
      _
    $region27: #{adapted_model_forward.1} parent=1 // pred_check_branch
      %48 = sbr.rel (0) target = $region29
    $region28: #{adapted_model_forward.1} parent=1 // pred_region
      %49 = dma.done [#allocation4], 256
    $region29: #{adapted_model_forward.1} parent=1 // pred_fallthru
      _
    // Predicated region
    $region30: #{adapted_model_forward.1} parent=1 // pred_check
      _
    $region31: #{adapted_model_forward.1} parent=1 // pred_check_branch
      %51 = sbr.rel (0) target = $region33
    $region32: #{adapted_model_forward.1} parent=1 // pred_region
      %52 = dma.done [#allocation7], 512
    $region33: #{adapted_model_forward.1} parent=1 // pred_fallthru
      _
    %v54 = vld [vmem:[#allocation3] sm:$0xff]
    %v55 = vld [vmem:[#allocation3 + $0x8] sm:$0xff]
    %v56 = vpack.c.bf16 %v54, %v54
    %v57 = vpack.c.bf16 %v55, %v55
    %v58 = vld [vmem:[%s3] sm:$0xff]
    %vm59 = vcmask 31744
    %v60 = vsel %vm59, %v58, -inf
    %61 = vmax.xlane.f32.xlu0 %v60
    %v62 = vpop.xlane.xlu0 %61
    %v63 = vsub.f32 %v58, %v62
    %v64 = vmul.f32 %v63, 1.442695
    %v65 = vpow.pop %v64
    %v66 = vsel %vm59, %v65, 0.0
    %67 = vadd.xlane.f32.xlu0 %v66
    %v68 = vpop.xlane.xlu0 %67
    %v69 = vrcp.pop %v68
    %v70 = vmul.f32 %v65, %v69
    %71 = vst.msk [vmem:[#allocation9] sm:$0xff] %vm59, %v70
    %vm72 = vcmask 64544
    %v73 = vsel %vm72, %v58, -inf
    %74 = vmax.xlane.f32.xlu0 %v73
    %v75 = vpop.xlane.xlu0 %74
    %v76 = vsub.f32 %v58, %v75
    %v77 = vmul.f32 %v76, 1.442695
    %v78 = vpow.pop %v77
    %80 = vrot.lane.b32.xlu0 %v78, 124
    %v81 = vpop.permute.xlu0 %80
    %v83 = vsel %vm59, %v81, 0.0
    %84 = vadd.xlane.f32.xlu0 %v83
    %v85 = vpop.xlane.xlu0 %84
    %v86 = vrcp.pop %v85
    %v87 = vmul.f32 %v78, %v86
    %88 = vst.msk [vmem:[#allocation9] sm:$0xff] %vm72, %v87
    %v89 = vld [vmem:[%s1] sm:$0xff]
    %v90 = vld [vmem:[%s1 + $0x8] sm:$0xff]
    %v91 = vld [vmem:[%s1 + $0x10] sm:$0xff]
    %v92 = vld [vmem:[%s1 + $0x18] sm:$0xff]
    %v93 = vld [vmem:[%s1 + $0x20] sm:$0xff]
    %v94 = vld [vmem:[%s1 + $0x28] sm:$0xff]
    %v95 = vld [vmem:[%s1 + $0x30] sm:$0xff]
    %v96 = vld [vmem:[%s1 + $0x38] sm:$0xff]
    %v97 = vld [vmem:[%s1 + $0x40] sm:$0xff]
    %v98 = vld [vmem:[%s1 + $0x48] sm:$0xff]
    %v99 = vld [vmem:[%s1 + $0x50] sm:$0xff]
    %v100 = vld [vmem:[%s1 + $0x58] sm:$0xff]
    %v101 = vld [vmem:[%s1 + $0x60] sm:$0xff]
    %v102 = vld [vmem:[%s1 + $0x68] sm:$0xff]
    %v103 = vld [vmem:[%s1 + $0x70] sm:$0xff]
    %v104 = vld [vmem:[%s1 + $0x78] sm:$0xff]
    %v105 = vld [vmem:[%s1 + $0x80] sm:$0xff]
    %v106 = vld [vmem:[%s1 + $0x88] sm:$0xff]
    %v107 = vld [vmem:[%s1 + $0x90] sm:$0xff]
    %v108 = vld [vmem:[%s1 + $0x98] sm:$0xff]
    %v109 = vld [vmem:[%s1 + $0xa0] sm:$0xff]
    %v110 = vld [vmem:[%s1 + $0xa8] sm:$0xff]
    %v111 = vld [vmem:[%s1 + $0xb0] sm:$0xff]
    %v112 = vld [vmem:[%s1 + $0xb8] sm:$0xff]
    %v113 = vld [vmem:[%s1 + $0xc0] sm:$0xff]
    %v114 = vld [vmem:[%s1 + $0xc8] sm:$0xff]
    %v115 = vld [vmem:[%s1 + $0xd0] sm:$0xff]
    %v116 = vld [vmem:[%s1 + $0xd8] sm:$0xff]
    %v117 = vld [vmem:[%s1 + $0xe0] sm:$0xff]
    %v118 = vld [vmem:[%s1 + $0xe8] sm:$0xff]
    %v119 = vld [vmem:[%s1 + $0xf0] sm:$0xff]
    %v120 = vld [vmem:[%s1 + $0xf8] sm:$0xff]
    %v121 = vld [vmem:[%s2] sm:$0x3]
    %v123 = vlaneseq
    %v124 = vshrl.u32 %v123, 7
    %v125 = vsub.s32 0, %v124
    %v126 = vrot.slane %v121, %v125
    %v127 = vlaneseq
    %v128 = vshrl.u32 %v127, 7
    %v129 = vsub.s32 1, %v128
    %v130 = vrot.slane %v121, %v129
    %v165 = vunpack.c.l.b16 %v89
    %v166 = vunpack.c.h.b16 %v89
    %v167 = vunpack.c.l.b16 %v90
    %v168 = vunpack.c.h.b16 %v90
    %v169 = vunpack.c.l.b16 %v91
    %v170 = vunpack.c.h.b16 %v91
    %v171 = vunpack.c.l.b16 %v92
    %v172 = vunpack.c.h.b16 %v92
    %v173 = vunpack.c.l.b16 %v93
    %v174 = vunpack.c.h.b16 %v93
    %v175 = vunpack.c.l.b16 %v94
    %v176 = vunpack.c.h.b16 %v94
    %v177 = vunpack.c.l.b16 %v95
    %v178 = vunpack.c.h.b16 %v95
    %v179 = vunpack.c.l.b16 %v96
    %v180 = vunpack.c.h.b16 %v96
    %v181 = vunpack.c.l.b16 %v97
    %v182 = vunpack.c.h.b16 %v97
    %v183 = vunpack.c.l.b16 %v98
    %v184 = vunpack.c.h.b16 %v98
    %v185 = vunpack.c.l.b16 %v99
    %v186 = vunpack.c.h.b16 %v99
    %v187 = vunpack.c.l.b16 %v100
    %v188 = vunpack.c.h.b16 %v100
    %v189 = vunpack.c.l.b16 %v101
    %v190 = vunpack.c.h.b16 %v101
    %v191 = vunpack.c.l.b16 %v102
    %v192 = vunpack.c.h.b16 %v102
    %v193 = vunpack.c.l.b16 %v103
    %v194 = vunpack.c.h.b16 %v103
    %v195 = vunpack.c.l.b16 %v104
    %v196 = vunpack.c.h.b16 %v104
    %v197 = vunpack.c.l.b16 %v105
    %v198 = vunpack.c.h.b16 %v105
    %v199 = vunpack.c.l.b16 %v106
    %v200 = vunpack.c.h.b16 %v106
    %v201 = vunpack.c.l.b16 %v107
    %v202 = vunpack.c.h.b16 %v107
    %v203 = vunpack.c.l.b16 %v108
    %v204 = vunpack.c.h.b16 %v108
    %v205 = vunpack.c.l.b16 %v109
    %v206 = vunpack.c.h.b16 %v109
    %v207 = vunpack.c.l.b16 %v110
    %v208 = vunpack.c.h.b16 %v110
    %v209 = vunpack.c.l.b16 %v111
    %v210 = vunpack.c.h.b16 %v111
    %v211 = vunpack.c.l.b16 %v112
    %v212 = vunpack.c.h.b16 %v112
    %v213 = vunpack.c.l.b16 %v113
    %v214 = vunpack.c.h.b16 %v113
    %v215 = vunpack.c.l.b16 %v114
    %v216 = vunpack.c.h.b16 %v114
    %v217 = vunpack.c.l.b16 %v115
    %v218 = vunpack.c.h.b16 %v115
    %v219 = vunpack.c.l.b16 %v116
    %v220 = vunpack.c.h.b16 %v116
    %v221 = vunpack.c.l.b16 %v117
    %v222 = vunpack.c.h.b16 %v117
    %v223 = vunpack.c.l.b16 %v118
    %v224 = vunpack.c.h.b16 %v118
    %v225 = vunpack.c.l.b16 %v119
    %v226 = vunpack.c.h.b16 %v119
    %v227 = vunpack.c.l.b16 %v120
    %v228 = vunpack.c.h.b16 %v120
    %v229 = vpack.c.b16 %v167, %v165
    %v230 = vpack.c.b16 %v168, %v166
    %v231 = vpack.c.b16 %v171, %v169
    %v232 = vpack.c.b16 %v172, %v170
    %v233 = vpack.c.b16 %v175, %v173
    %v234 = vpack.c.b16 %v176, %v174
    %v235 = vpack.c.b16 %v179, %v177
    %v236 = vpack.c.b16 %v180, %v178
    %v237 = vpack.c.b16 %v183, %v181
    %v238 = vpack.c.b16 %v184, %v182
    %v239 = vpack.c.b16 %v187, %v185
    %v240 = vpack.c.b16 %v188, %v186
    %v241 = vpack.c.b16 %v191, %v189
    %v242 = vpack.c.b16 %v192, %v190
    %v243 = vpack.c.b16 %v195, %v193
    %v244 = vpack.c.b16 %v196, %v194
    %v245 = vpack.c.b16 %v199, %v197
    %v246 = vpack.c.b16 %v200, %v198
    %v247 = vpack.c.b16 %v203, %v201
    %v248 = vpack.c.b16 %v204, %v202
    %v249 = vpack.c.b16 %v207, %v205
    %v250 = vpack.c.b16 %v208, %v206
    %v251 = vpack.c.b16 %v211, %v209
    %v252 = vpack.c.b16 %v212, %v210
    %v253 = vpack.c.b16 %v215, %v213
    %v254 = vpack.c.b16 %v216, %v214
    %v255 = vpack.c.b16 %v219, %v217
    %v256 = vpack.c.b16 %v220, %v218
    %v257 = vpack.c.b16 %v223, %v221
    %v258 = vpack.c.b16 %v224, %v222
    %v259 = vpack.c.b16 %v227, %v225
    %v260 = vpack.c.b16 %v228, %v226
    %293 = vmatprep.subr.bf16.mxu0 %v230
    %294 = vmatpush1.bf16.msra.mxu0 %v229
    %295 = vmatprep.subr.bf16.mxu0 %v232
    %296 = vmatpush1.bf16.msra.mxu0 %v231
    %297 = vmatprep.subr.bf16.mxu0 %v234
    %298 = vmatpush1.bf16.msra.mxu0 %v233
    %299 = vmatprep.subr.bf16.mxu0 %v236
    %300 = vmatpush1.bf16.msra.mxu0 %v235
    %301 = vmatprep.subr.bf16.mxu0 %v238
    %302 = vmatpush1.bf16.msra.mxu0 %v237
    %303 = vmatprep.subr.bf16.mxu0 %v240
    %304 = vmatpush1.bf16.msra.mxu0 %v239
    %305 = vmatprep.subr.bf16.mxu0 %v242
    %306 = vmatpush1.bf16.msra.mxu0 %v241
    %307 = vmatprep.subr.bf16.mxu0 %v244
    %308 = vmatpush1.bf16.msra.mxu0 %v243
    %309 = vmatprep.subr.bf16.mxu0 %v246
    %310 = vmatpush1.bf16.msra.mxu0 %v245
    %311 = vmatprep.subr.bf16.mxu0 %v248
    %312 = vmatpush1.bf16.msra.mxu0 %v247
    %313 = vmatprep.subr.bf16.mxu0 %v250
    %314 = vmatpush1.bf16.msra.mxu0 %v249
    %315 = vmatprep.subr.bf16.mxu0 %v252
    %316 = vmatpush1.bf16.msra.mxu0 %v251
    %317 = vmatprep.subr.bf16.mxu0 %v254
    %318 = vmatpush1.bf16.msra.mxu0 %v253
    %319 = vmatprep.subr.bf16.mxu0 %v256
    %320 = vmatpush1.bf16.msra.mxu0 %v255
    %321 = vmatprep.subr.bf16.mxu0 %v258
    %322 = vmatpush1.bf16.msra.mxu0 %v257
    %323 = vmatprep.subr.bf16.mxu0 %v260
    %324 = vmatpush1.bf16.msra.mxu0 %v259
    %325 = vmatprep.mubr.bf16.mxu0 %v57
    %326 = vmatmul.mubr.bf16.gmra.mrb[0].mxu0 %v56
    %v327 = vpop.f32.mrb[0].mxu0
    %v328 = vadd.f32 %v126, %v327
    %v329 = vpop.f32.mrb[0].mxu0
    %v330 = vadd.f32 %v130, %v329
    %v331 = vpop.f32.mrb[0].mxu0
    %v332 = vpop.f32.mrb[0].mxu0
    %333 = vdwg.mxu0
    %v334 = vld [vmem:[%s4] sm:$0xf]
    %v335 = vld [vmem:[%s4 + $0x4] sm:$0xf]
    %v336 = vld [vmem:[%s4 + $0x8] sm:$0xf]
    %v337 = vld [vmem:[%s4 + $0xc] sm:$0xf]
    %v338 = vld [vmem:[%s4 + $0x10] sm:$0xf]
    %v339 = vld [vmem:[%s4 + $0x14] sm:$0xf]
    %v340 = vld [vmem:[%s4 + $0x18] sm:$0xf]
    %v341 = vld [vmem:[%s4 + $0x1c] sm:$0xf]
    %v342 = vld [vmem:[%s4 + $0x20] sm:$0xf]
    %v343 = vld [vmem:[%s4 + $0x24] sm:$0xf]
    %v344 = vld [vmem:[%s4 + $0x28] sm:$0xf]
    %v345 = vld [vmem:[%s4 + $0x2c] sm:$0xf]
    %v346 = vld [vmem:[%s4 + $0x30] sm:$0xf]
    %v347 = vld [vmem:[%s4 + $0x34] sm:$0xf]
    %v348 = vld [vmem:[%s4 + $0x38] sm:$0xf]
    %v349 = vld [vmem:[%s4 + $0x3c] sm:$0xf]
    %v366 = vunpack.c.l.b16 %v334
    %v367 = vunpack.c.l.b16 %v335
    %v368 = vunpack.c.l.b16 %v336
    %v369 = vunpack.c.l.b16 %v337
    %v370 = vunpack.c.l.b16 %v338
    %v371 = vunpack.c.l.b16 %v339
    %v372 = vunpack.c.l.b16 %v340
    %v373 = vunpack.c.l.b16 %v341
    %v374 = vunpack.c.l.b16 %v342
    %v375 = vunpack.c.l.b16 %v343
    %v376 = vunpack.c.l.b16 %v344
    %v377 = vunpack.c.l.b16 %v345
    %v378 = vunpack.c.l.b16 %v346
    %v379 = vunpack.c.l.b16 %v347
    %v380 = vunpack.c.l.b16 %v348
    %v381 = vunpack.c.l.b16 %v349
    %v382 = vpack.c.b16 %v367, %v366
    %v383 = vpack.c.b16 %v369, %v368
    %v384 = vpack.c.b16 %v371, %v370
    %v385 = vpack.c.b16 %v373, %v372
    %v386 = vpack.c.b16 %v375, %v374
    %v387 = vpack.c.b16 %v377, %v376
    %v388 = vpack.c.b16 %v379, %v378
    %v389 = vpack.c.b16 %v381, %v380
    %398 = vmatprep.subr.bf16.mxu0 0
    %399 = vmatpush1.bf16.msra.mxu0 %v382
    %400 = vmatprep.subr.bf16.mxu0 0
    %401 = vmatpush1.bf16.msra.mxu0 %v383
    %402 = vmatprep.subr.bf16.mxu0 0
    %403 = vmatpush1.bf16.msra.mxu0 %v384
    %404 = vmatprep.subr.bf16.mxu0 0
    %405 = vmatpush1.bf16.msra.mxu0 %v385
    %406 = vmatprep.subr.bf16.mxu0 0
    %407 = vmatpush1.bf16.msra.mxu0 %v386
    %408 = vmatprep.subr.bf16.mxu0 0
    %409 = vmatpush1.bf16.msra.mxu0 %v387
    %410 = vmatprep.subr.bf16.mxu0 0
    %411 = vmatpush1.bf16.msra.mxu0 %v388
    %412 = vmatprep.subr.bf16.mxu0 0
    %413 = vmatpush1.bf16.msra.mxu0 %v389
    %414 = vmatprep.subr.bf16.mxu0 0
    %415 = vmatpush1.bf16.msra.mxu0 0
    %416 = vmatprep.subr.bf16.mxu0 0
    %417 = vmatpush1.bf16.msra.mxu0 0
    %418 = vmatprep.subr.bf16.mxu0 0
    %419 = vmatpush1.bf16.msra.mxu0 0
    %420 = vmatprep.subr.bf16.mxu0 0
    %421 = vmatpush1.bf16.msra.mxu0 0
    %422 = vmatprep.subr.bf16.mxu0 0
    %423 = vmatpush1.bf16.msra.mxu0 0
    %424 = vmatprep.subr.bf16.mxu0 0
    %425 = vmatpush1.bf16.msra.mxu0 0
    %426 = vmatprep.subr.bf16.mxu0 0
    %427 = vmatpush1.bf16.msra.mxu0 0
    %428 = vmatprep.subr.bf16.mxu0 0
    %429 = vmatpush1.bf16.msra.mxu0 0
    %430 = vmatprep.mubr.bf16.mxu0 0
    %431 = vmatmul.mubr.bf16.gmra.mrb[0].mxu0 %v56
    %v432 = vpop.f32.mrb[0].mxu0
    %v433 = vadd.f32 0.0, %v432
    %v434 = vpop.f32.mrb[0].mxu0
    %v435 = vpop.f32.mrb[0].mxu0
    %v436 = vpop.f32.mrb[0].mxu0
    %437 = vdwg.mxu0
    %439 = vset.pattern.permute.xlu0 0
    %440 = vperm.xlu0 %439, %v70
    %v441 = vpop.permute.xlu0 %440
    %v443 = vmul.f32 %v441, %v433
    %v444 = vadd.f32 %v443, 0.0
    %445 = vset.pattern.permute.xlu0 1
    %446 = vperm.xlu0 %445, %v70
    %v447 = vpop.permute.xlu0 %446
    %v449 = vmul.f32 %v447, %v433
    %451 = vrot.lane.b32.xlu0 %v449, 120
    %v452 = vpop.permute.xlu0 %451
    %v454 = vadd.f32 %v444, %v452
    %455 = vset.pattern.permute.xlu0 2
    %456 = vperm.xlu0 %455, %v70
    %v457 = vpop.permute.xlu0 %456
    %v459 = vmul.f32 %v457, %v433
    %461 = vrot.lane.b32.xlu0 %v459, 112
    %v462 = vpop.permute.xlu0 %461
    %v464 = vadd.f32 %v454, %v462
    %465 = vset.pattern.permute.xlu0 3
    %466 = vperm.xlu0 %465, %v70
    %v467 = vpop.permute.xlu0 %466
    %v469 = vmul.f32 %v467, %v433
    %471 = vrot.lane.b32.xlu0 %v469, 104
    %v472 = vpop.permute.xlu0 %471
    %v474 = vadd.f32 %v464, %v472
    %s475 = scalar_lea.vmem %s4, 64
    %v476 = vld [vmem:[%s475] sm:$0xf]
    %v477 = vld [vmem:[%s475 + $0x4] sm:$0xf]
    %v478 = vld [vmem:[%s475 + $0x8] sm:$0xf]
    %v479 = vld [vmem:[%s475 + $0xc] sm:$0xf]
    %v480 = vld [vmem:[%s475 + $0x10] sm:$0xf]
    %v481 = vld [vmem:[%s475 + $0x14] sm:$0xf]
    %v482 = vld [vmem:[%s475 + $0x18] sm:$0xf]
    %v483 = vld [vmem:[%s475 + $0x1c] sm:$0xf]
    %v484 = vld [vmem:[%s475 + $0x20] sm:$0xf]
    %v485 = vld [vmem:[%s475 + $0x24] sm:$0xf]
    %v486 = vld [vmem:[%s475 + $0x28] sm:$0xf]
    %v487 = vld [vmem:[%s475 + $0x2c] sm:$0xf]
    %v488 = vld [vmem:[%s475 + $0x30] sm:$0xf]
    %v489 = vld [vmem:[%s475 + $0x34] sm:$0xf]
    %v490 = vld [vmem:[%s475 + $0x38] sm:$0xf]
    %v491 = vld [vmem:[%s475 + $0x3c] sm:$0xf]
    %v508 = vunpack.c.l.b16 %v476
    %v509 = vunpack.c.l.b16 %v477
    %v510 = vunpack.c.l.b16 %v478
    %v511 = vunpack.c.l.b16 %v479
    %v512 = vunpack.c.l.b16 %v480
    %v513 = vunpack.c.l.b16 %v481
    %v514 = vunpack.c.l.b16 %v482
    %v515 = vunpack.c.l.b16 %v483
    %v516 = vunpack.c.l.b16 %v484
    %v517 = vunpack.c.l.b16 %v485
    %v518 = vunpack.c.l.b16 %v486
    %v519 = vunpack.c.l.b16 %v487
    %v520 = vunpack.c.l.b16 %v488
    %v521 = vunpack.c.l.b16 %v489
    %v522 = vunpack.c.l.b16 %v490
    %v523 = vunpack.c.l.b16 %v491
    %v524 = vpack.c.b16 %v509, %v508
    %v525 = vpack.c.b16 %v511, %v510
    %v526 = vpack.c.b16 %v513, %v512
    %v527 = vpack.c.b16 %v515, %v514
    %v528 = vpack.c.b16 %v517, %v516
    %v529 = vpack.c.b16 %v519, %v518
    %v530 = vpack.c.b16 %v521, %v520
    %v531 = vpack.c.b16 %v523, %v522
    %540 = vmatprep.subr.bf16.mxu0 0
    %541 = vmatpush1.bf16.msra.mxu0 %v524
    %542 = vmatprep.subr.bf16.mxu0 0
    %543 = vmatpush1.bf16.msra.mxu0 %v525
    %544 = vmatprep.subr.bf16.mxu0 0
    %545 = vmatpush1.bf16.msra.mxu0 %v526
    %546 = vmatprep.subr.bf16.mxu0 0
    %547 = vmatpush1.bf16.msra.mxu0 %v527
    %548 = vmatprep.subr.bf16.mxu0 0
    %549 = vmatpush1.bf16.msra.mxu0 %v528
    %550 = vmatprep.subr.bf16.mxu0 0
    %551 = vmatpush1.bf16.msra.mxu0 %v529
    %552 = vmatprep.subr.bf16.mxu0 0
    %553 = vmatpush1.bf16.msra.mxu0 %v530
    %554 = vmatprep.subr.bf16.mxu0 0
    %555 = vmatpush1.bf16.msra.mxu0 %v531
    %556 = vmatprep.subr.bf16.mxu0 0
    %557 = vmatpush1.bf16.msra.mxu0 0
    %558 = vmatprep.subr.bf16.mxu0 0
    %559 = vmatpush1.bf16.msra.mxu0 0
    %560 = vmatprep.subr.bf16.mxu0 0
    %561 = vmatpush1.bf16.msra.mxu0 0
    %562 = vmatprep.subr.bf16.mxu0 0
    %563 = vmatpush1.bf16.msra.mxu0 0
    %564 = vmatprep.subr.bf16.mxu0 0
    %565 = vmatpush1.bf16.msra.mxu0 0
    %566 = vmatprep.subr.bf16.mxu0 0
    %567 = vmatpush1.bf16.msra.mxu0 0
    %568 = vmatprep.subr.bf16.mxu0 0
    %569 = vmatpush1.bf16.msra.mxu0 0
    %570 = vmatprep.subr.bf16.mxu0 0
    %571 = vmatpush1.bf16.msra.mxu0 0
    %572 = vmatprep.mubr.bf16.mxu0 0
    %573 = vmatmul.mubr.bf16.gmra.mrb[0].mxu0 %v57
    %v574 = vpop.f32.mrb[0].mxu0
    %v575 = vadd.f32 0.0, %v574
    %v576 = vpop.f32.mrb[0].mxu0
    %v577 = vpop.f32.mrb[0].mxu0
    %v578 = vpop.f32.mrb[0].mxu0
    %579 = vdwg.mxu0
    %581 = vset.pattern.permute.xlu0 4
    %582 = vperm.xlu0 %581, %v87
    %v583 = vpop.permute.xlu0 %582
    %v585 = vmul.f32 %v583, %v575
    %v586 = vadd.f32 %v474, %v585
    %587 = vset.pattern.permute.xlu0 5
    %588 = vperm.xlu0 %587, %v87
    %v589 = vpop.permute.xlu0 %588
    %v591 = vmul.f32 %v589, %v575
    %593 = vrot.lane.b32.xlu0 %v591, 120
    %v594 = vpop.permute.xlu0 %593
    %v596 = vadd.f32 %v586, %v594
    %597 = vset.pattern.permute.xlu0 6
    %598 = vperm.xlu0 %597, %v87
    %v599 = vpop.permute.xlu0 %598
    %v601 = vmul.f32 %v599, %v575
    %603 = vrot.lane.b32.xlu0 %v601, 112
    %v604 = vpop.permute.xlu0 %603
    %v606 = vadd.f32 %v596, %v604
    %607 = vset.pattern.permute.xlu0 7
    %608 = vperm.xlu0 %607, %v87
    %v609 = vpop.permute.xlu0 %608
    %v611 = vmul.f32 %v609, %v575
    %613 = vrot.lane.b32.xlu0 %v611, 104
    %v614 = vpop.permute.xlu0 %613
    %v616 = vadd.f32 %v606, %v614
    %v617 = vmul.f32 %v441, %v616
    %vm618 = vcmask 64512
    %619 = vst.msk [vmem:[#allocation2] sm:$0xff] %vm618, %v617
    %v620 = vmul.f32 %v447, %v616
    %622 = vrot.lane.b32.xlu0 %v620, 8
    %v623 = vpop.permute.xlu0 %622
    %vm625 = vcmask 130112
    %626 = vst.msk [vmem:[#allocation2] sm:$0xff] %vm625, %v623
    %v627 = vmul.f32 %v457, %v616
    %629 = vrot.lane.b32.xlu0 %v627, 16
    %v630 = vpop.permute.xlu0 %629
    %vm632 = vcmask 195712
    %633 = vst.msk [vmem:[#allocation2] sm:$0xff] %vm632, %v630
    %v634 = vmul.f32 %v467, %v616
    %636 = vrot.lane.b32.xlu0 %v634, 24
    %v637 = vpop.permute.xlu0 %636
    %vm639 = vcmask 261312
    %640 = vst.msk [vmem:[#allocation2] sm:$0xff] %vm639, %v637
    %v641 = vld [vmem:[#allocation2] sm:$0xff]
    %v642 = vpack.c.bf16 %v641, %v641
    %v643 = vld [vmem:[#allocation6] sm:$0xf]
    %v644 = vld [vmem:[#allocation6 + $0x4] sm:$0xf]
    %v645 = vld [vmem:[#allocation6 + $0x8] sm:$0xf]
    %v646 = vld [vmem:[#allocation6 + $0xc] sm:$0xf]
    %v651 = vunpack.c.l.b16 %v643
    %v652 = vunpack.c.l.b16 %v644
    %v653 = vunpack.c.l.b16 %v645
    %v654 = vunpack.c.l.b16 %v646
    %v655 = vpack.c.b16 %v652, %v651
    %v656 = vpack.c.b16 %v654, %v653
    %vm659 = vcmask 261120
    %v661 = vsel %vm659, %v642, 0
    %663 = vmatprep.subr.bf16.mxu0 0
    %664 = vmatpush1.bf16.msra.mxu0 %v655
    %665 = vmatprep.subr.bf16.mxu0 0
    %666 = vmatpush1.bf16.msra.mxu0 %v656
    %667 = vmatprep.subr.bf16.mxu0 0
    %668 = vmatpush1.bf16.msra.mxu0 0
    %669 = vmatprep.subr.bf16.mxu0 0
    %670 = vmatpush1.bf16.msra.mxu0 0
    %671 = vmatprep.subr.bf16.mxu0 0
    %672 = vmatpush1.bf16.msra.mxu0 0
    %673 = vmatprep.subr.bf16.mxu0 0
    %674 = vmatpush1.bf16.msra.mxu0 0
    %675 = vmatprep.subr.bf16.mxu0 0
    %676 = vmatpush1.bf16.msra.mxu0 0
    %677 = vmatprep.subr.bf16.mxu0 0
    %678 = vmatpush1.bf16.msra.mxu0 0
    %679 = vmatprep.subr.bf16.mxu0 0
    %680 = vmatpush1.bf16.msra.mxu0 0
    %681 = vmatprep.subr.bf16.mxu0 0
    %682 = vmatpush1.bf16.msra.mxu0 0
    %683 = vmatprep.subr.bf16.mxu0 0
    %684 = vmatpush1.bf16.msra.mxu0 0
    %685 = vmatprep.subr.bf16.mxu0 0
    %686 = vmatpush1.bf16.msra.mxu0 0
    %687 = vmatprep.subr.bf16.mxu0 0
    %688 = vmatpush1.bf16.msra.mxu0 0
    %689 = vmatprep.subr.bf16.mxu0 0
    %690 = vmatpush1.bf16.msra.mxu0 0
    %691 = vmatprep.subr.bf16.mxu0 0
    %692 = vmatpush1.bf16.msra.mxu0 0
    %693 = vmatprep.subr.bf16.mxu0 0
    %694 = vmatpush1.bf16.msra.mxu0 0
    %695 = vmatprep.mubr.bf16.mxu0 0
    %696 = vmatmul.mubr.bf16.gmra.mrb[0].mxu0 %v661
    %v697 = vpop.f32.mrb[0].mxu0
    %v698 = vadd.f32 0.0, %v697
    %v699 = vpop.f32.mrb[0].mxu0
    %v700 = vpop.f32.mrb[0].mxu0
    %v701 = vpop.f32.mrb[0].mxu0
    %702 = vdwg.mxu0
    %v703 = vadd.f32 %v328, %v698
    %704 = vst [vmem:[#allocation8] sm:$0xff] %v703
    %v705 = vmul.f32 %v583, %v616
    %706 = vst.msk [vmem:[#allocation2] sm:$0xff] %vm618, %v705
    %v707 = vmul.f32 %v589, %v616
    %709 = vrot.lane.b32.xlu0 %v707, 8
    %v710 = vpop.permute.xlu0 %709
    %712 = vst.msk [vmem:[#allocation2] sm:$0xff] %vm625, %v710
    %v713 = vmul.f32 %v599, %v616
    %715 = vrot.lane.b32.xlu0 %v713, 16
    %v716 = vpop.permute.xlu0 %715
    %718 = vst.msk [vmem:[#allocation2] sm:$0xff] %vm632, %v716
    %v719 = vmul.f32 %v609, %v616
    %721 = vrot.lane.b32.xlu0 %v719, 24
    %v722 = vpop.permute.xlu0 %721
    %724 = vst.msk [vmem:[#allocation2] sm:$0xff] %vm639, %v722
    %v725 = vld [vmem:[#allocation2] sm:$0xff]
    %v726 = vpack.c.bf16 %v725, %v725
    %s727 = scalar_lea.vmem [#allocation6], 16
    %v728 = vld [vmem:[%s727] sm:$0xf]
    %v729 = vld [vmem:[%s727 + $0x4] sm:$0xf]
    %v730 = vld [vmem:[%s727 + $0x8] sm:$0xf]
    %v731 = vld [vmem:[%s727 + $0xc] sm:$0xf]
    %v736 = vunpack.c.l.b16 %v728
    %v737 = vunpack.c.l.b16 %v729
    %v738 = vunpack.c.l.b16 %v730
    %v739 = vunpack.c.l.b16 %v731
    %v740 = vpack.c.b16 %v737, %v736
    %v741 = vpack.c.b16 %v739, %v738
    %v745 = vsel %vm659, %v726, 0
    %747 = vmatprep.subr.bf16.mxu0 0
    %748 = vmatpush1.bf16.msra.mxu0 %v740
    %749 = vmatprep.subr.bf16.mxu0 0
    %750 = vmatpush1.bf16.msra.mxu0 %v741
    %751 = vmatprep.subr.bf16.mxu0 0
    %752 = vmatpush1.bf16.msra.mxu0 0
    %753 = vmatprep.subr.bf16.mxu0 0
    %754 = vmatpush1.bf16.msra.mxu0 0
    %755 = vmatprep.subr.bf16.mxu0 0
    %756 = vmatpush1.bf16.msra.mxu0 0
    %757 = vmatprep.subr.bf16.mxu0 0
    %758 = vmatpush1.bf16.msra.mxu0 0
    %759 = vmatprep.subr.bf16.mxu0 0
    %760 = vmatpush1.bf16.msra.mxu0 0
    %761 = vmatprep.subr.bf16.mxu0 0
    %762 = vmatpush1.bf16.msra.mxu0 0
    %763 = vmatprep.subr.bf16.mxu0 0
    %764 = vmatpush1.bf16.msra.mxu0 0
    %765 = vmatprep.subr.bf16.mxu0 0
    %766 = vmatpush1.bf16.msra.mxu0 0
    %767 = vmatprep.subr.bf16.mxu0 0
    %768 = vmatpush1.bf16.msra.mxu0 0
    %769 = vmatprep.subr.bf16.mxu0 0
    %770 = vmatpush1.bf16.msra.mxu0 0
    %771 = vmatprep.subr.bf16.mxu0 0
    %772 = vmatpush1.bf16.msra.mxu0 0
    %773 = vmatprep.subr.bf16.mxu0 0
    %774 = vmatpush1.bf16.msra.mxu0 0
    %775 = vmatprep.subr.bf16.mxu0 0
    %776 = vmatpush1.bf16.msra.mxu0 0
    %777 = vmatprep.subr.bf16.mxu0 0
    %778 = vmatpush1.bf16.msra.mxu0 0
    %779 = vmatprep.mubr.bf16.mxu0 0
    %780 = vmatmul.mubr.bf16.gmra.mrb[0].mxu0 %v745
    %v781 = vpop.f32.mrb[0].mxu0
    %v782 = vadd.f32 0.0, %v781
    %v783 = vpop.f32.mrb[0].mxu0
    %v784 = vpop.f32.mrb[0].mxu0
    %v785 = vpop.f32.mrb[0].mxu0
    %786 = vdwg.mxu0
    %v787 = vadd.f32 %v330, %v782
    %788 = vst [vmem:[#allocation8 + $0x8] sm:$0xff] %v787
    // Predicated region
    $region34: #{adapted_model_forward.1} parent=1 // pred_check
      _
    $region35: #{adapted_model_forward.1} parent=1 // pred_check_branch
      %790 = sbr.rel (0) target = $region37
    $region36: #{adapted_model_forward.1} parent=1 // pred_region
      %s792 = ssub.s32 256, 256
      %793 = vsyncadd [#allocation5], %s792
      %s795 = sshll.u32 [#allocation8], 4
      %s796 = int_to_ptr.vmem [resolvable:$true] %s795
      %798 = dma.vmem_to_hbm [thread:$0]  %s796, 256, %s6, [#allocation5]
    $region37: #{adapted_model_forward.1} parent=1 // pred_fallthru
      _
    // Predicated region
    $region38: #{adapted_model_forward.1} parent=1 // pred_check
      _
    $region39: #{adapted_model_forward.1} parent=1 // pred_check_branch
      %800 = sbr.rel (0) target = $region41
    $region40: #{adapted_model_forward.1} parent=1 // pred_region
      %s802 = ssub.s32 128, 128
      %803 = vsyncadd [#allocation10], %s802
      %s805 = sshll.u32 [#allocation9], 4
      %s806 = int_to_ptr.vmem [resolvable:$true] %s805
      %808 = dma.vmem_to_hbm [thread:$0]  %s806, 128, %s7, [#allocation10]
    $region41: #{adapted_model_forward.1} parent=1 // pred_fallthru
      _
    // Predicated region
    $region42: #{adapted_model_forward.1} parent=1 // pred_check
      _
    $region43: #{adapted_model_forward.1} parent=1 // pred_check_branch
      %810 = sbr.rel (0) target = $region45
    $region44: #{adapted_model_forward.1} parent=1 // pred_region
      %811 = dma.done [#allocation5], 256
    $region45: #{adapted_model_forward.1} parent=1 // pred_fallthru
      _
    // Predicated region
    $region46: #{adapted_model_forward.1} parent=1 // pred_check
      _
    $region47: #{adapted_model_forward.1} parent=1 // pred_check_branch
      %813 = sbr.rel (0) target = $region49
    $region48: #{adapted_model_forward.1} parent=1 // pred_region
      %814 = dma.done [#allocation10], 128
    $region49: #{adapted_model_forward.1} parent=1 // pred_fallthru
      _
    %815 = vsyncpa [#allocation4], 1
    %816 = vsyncpa [#allocation7], 1
    %817 = vsyncpa [#allocation5], 1
    %818 = vsyncpa [#allocation10], 1

</llo_original>
